<compile_context>
chip_gen: v6e
topology: v6e:2x2x1
jax: 0.10.0
libtpu: 0.0.40
codegen_flags: <defaults>
</compile_context>

<pallas_src>
import functools

import jax
import jax.numpy as jnp
from jax.experimental import pallas as pl
from jax.experimental.pallas import tpu as pltpu

LANES = 128
SUBLANES = 8
BLOCK_ROWS_MAX = 8192   # (8192, 128) f32 = 4 MiB per input block

_NUM_TC_CACHE = None


def _num_tensorcores() -> int:
    """Best-effort TensorCores-per-chip (1 on v5e/v6e, 2 on v7x).

    Falls back to 2: a 2-way 'parallel' split is correct everywhere and nearly
    free on single-TensorCore chips, while being the ~2x HBM lever on v7x.
    """
    global _NUM_TC_CACHE
    if _NUM_TC_CACHE is not None:
        return _NUM_TC_CACHE
    n = 2
    try:
        info = pltpu.get_tpu_info()
        for name in ("num_tensorcores", "tensorcores_per_chip",
                     "num_cores_per_chip", "num_cores", "cores_per_chip"):
            v = getattr(info, name, None)
            if isinstance(v, int) and v >= 1:
                n = max(1, min(int(v), 2))
                break
    except Exception:
        pass
    _NUM_TC_CACHE = n
    return n


def _round_up(x: int, m: int) -> int:
    return ((x + m - 1) // m) * m


def _sse_kernel(p_ref, t_ref, o_ref, *, block_rows, tiles_per_part, n_rows,
                any_edge):
    """Accumulate squared errors into a lane-wide (1, 8, 128) partial-sum block."""
    part = pl.program_id(0)
    it = pl.program_id(1)

    @pl.when(it == 0)
    def _():
        o_ref[...] = jnp.zeros_like(o_ref)

    # Upcast in-kernel (inputs may be bf16); squared error on the VPU.
    d = p_ref[...].astype(jnp.float32) - t_ref[...].astype(jnp.float32)
    d2 = d * d  # (block_rows, 128)

    def accumulate(x):
        # Reduce only over the leading (vreg-count) axis: plain vector adds,
        # no cross-lane XLU work in the hot loop.
        o_ref[...] += x.reshape(block_rows // SUBLANES, SUBLANES, LANES).sum(
            axis=0, keepdims=True)

    if not any_edge:
        accumulate(d2)
    else:
        row_start = (part * tiles_per_part + it) * block_rows
        is_edge = row_start + block_rows > n_rows

        @pl.when(jnp.logical_not(is_edge))
        def _():
            # Fast path: fully in-range block, no mask work.
            accumulate(d2)

        @pl.when(is_edge)
        def _():
            # Rows past n_rows are either out-of-bounds garbage of the clipped
            # last block (possibly NaN/Inf) or a clamped duplicate block; the
            # select (NOT a multiply-by-mask) safely discards them.
            row_idx = jax.lax.broadcasted_iota(jnp.int32, (block_rows, LANES), 0)
            accumulate(jnp.where(row_idx + row_start < n_rows, d2, 0.0))


@jax.jit
def circular_loss(predictions: jnp.ndarray, targets: jnp.ndarray):
    """predictions, targets: [B, N, 4] -> dict of scalar losses (float32)."""
    B, N, C = predictions.shape
    assert C == 4, "expected 4 feature channels [swh, mwd_cos, mwd_sin, mwp]"
    M = B * N
    total = M * C  # flat element count; channel of flat index e is e % 4

    n_rows = total // LANES
    tail = total - n_rows * LANES  # < 128 leftover elements

    if n_rows < SUBLANES:
        # Truly tiny input (< 1024 elements): one zero-padded (8, 128) tile.
        # Zero padding contributes 0 to the SSE; cost is negligible here.
        pad = SUBLANES * LANES - total
        p2 = jnp.pad(predictions.reshape(-1), (0, pad)).reshape(SUBLANES, LANES)
        t2 = jnp.pad(targets.reshape(-1), (0, pad)).reshape(SUBLANES, LANES)
        n_rows = SUBLANES
        tail = 0
    elif tail == 0:
        # Main path: copy-free view — no transpose, no cast, no pad.
        p2 = predictions.reshape(n_rows, LANES)
        t2 = targets.reshape(n_rows, LANES)
    else:
        # Ragged tail: run the kernel on the 128-aligned prefix and add the
        # <128-element tail's SSE in pure JAX below (avoids full-array jnp.pad).
        # TODO(synk): XLA may still materialize this prefix slice as a copy.
        aligned = n_rows * LANES
        p2 = predictions.reshape(-1)[:aligned].reshape(n_rows, LANES)
        t2 = targets.reshape(-1)[:aligned].reshape(n_rows, LANES)

    # --- grid / block selection -------------------------------------------
    hw_parts = _num_tensorcores()
    target_rows = pl.cdiv(n_rows, hw_parts)
    block_rows = min(BLOCK_ROWS_MAX, max(SUBLANES, _round_up(target_rows, SUBLANES)))
    n_row_blocks = pl.cdiv(n_rows, block_rows)
    num_parts = max(1, min(hw_parts, n_row_blocks))
    tiles_per_part = pl.cdiv(n_row_blocks, num_parts)
    needs_clamp = num_parts * tiles_per_part > n_row_blocks
    any_edge = num_parts * tiles_per_part * block_rows > n_rows

    if needs_clamp:
        # A partition with no remaining work re-reads the last real block; its
        # contribution is zeroed by the edge mask.
        def in_map(p, i):
            return (jnp.minimum(p * tiles_per_part + i, n_row_blocks - 1), 0)
    else:
        def in_map(p, i):
            return (p * tiles_per_part + i, 0)

    # Scoped VMEM budget: 2 inputs x 2 pipeline buffers + f32 temporaries
    # (upcasts, d, d2, iota/select on the edge path) + slack.  v5e's default
    # scoped limit (16 MiB) is too small for 8192-row blocks.
    in_block_bytes = block_rows * LANES * predictions.dtype.itemsize
    f32_block_bytes = block_rows * LANES * 4
    vmem_limit_bytes = int(max(
        32 << 20,
        min(100 << 20, 4 * in_block_bytes + 6 * f32_block_bytes + (8 << 20))))

    kernel = functools.partial(
        _sse_kernel,
        block_rows=block_rows,
        tiles_per_part=tiles_per_part,
        n_rows=n_rows,
        any_edge=any_edge,
    )

    part_sse = pl.pallas_call(
        kernel,
        out_shape=jax.ShapeDtypeStruct((num_parts, SUBLANES, LANES), jnp.float32),
        grid=(num_parts, tiles_per_part),
        in_specs=[
            pl.BlockSpec((block_rows, LANES), in_map),
            pl.BlockSpec((block_rows, LANES), in_map),
        ],
        out_specs=pl.BlockSpec((1, SUBLANES, LANES), lambda p, i: (p, 0, 0)),
        compiler_params=pltpu.CompilerParams(
            dimension_semantics=("parallel", "arbitrary"),
            vmem_limit_bytes=vmem_limit_bytes),
    )(p2, t2)  # (num_parts, 8, 128) lane-split partial sums of squared errors

    # Cross-lane / cross-partition reduction on a tiny array in the wrapper.
    # Consecutive groups of 4 lanes are channels [0, 1, 2, 3].
    sse = part_sse.reshape(-1, C).sum(axis=0)  # (4,) per-channel SSE

    if tail:
        # <128-element ragged tail handled in pure JAX (starts at a multiple
        # of 4, so the lane%4 -> channel mapping is preserved).
        fp = predictions.reshape(-1)[total - tail:].astype(jnp.float32)
        ft = targets.reshape(-1)[total - tail:].astype(jnp.float32)
        dt = fp - ft
        sse = sse + (dt * dt).reshape(-1, C).sum(axis=0)

    inv_count = jnp.float32(1.0 / M)
    swh_loss = sse[0] * inv_count
    mwd_loss = (sse[1] + sse[2]) * inv_count  # cos MSE + sin MSE
    mwp_loss = sse[3] * inv_count
    total_loss = swh_loss + mwd_loss + mwp_loss
    return {
        "total_loss": total_loss,
        "swh_loss": swh_loss,
        "mwd_loss": mwd_loss,
        "mwp_loss": mwp_loss,
    }


def _reference(predictions, targets):
    """Pure-JAX reference matching the PyTorch module exactly."""
    def mse(a, b):
        return jnp.mean((a - b) ** 2)

    swh = mse(predictions[:, :, 0], targets[:, :, 0])
    mwd = mse(predictions[:, :, 1], targets[:, :, 1]) + mse(
        predictions[:, :, 2], targets[:, :, 2])
    mwp = mse(predictions[:, :, 3], targets[:, :, 3])
    return {
        "total_loss": swh + mwd + mwp,
        "swh_loss": swh,
        "mwd_loss": mwd,
        "mwp_loss": mwp,
    }


def _check(predictions, targets):
    out = circular_loss(predictions, targets)
    out = jax.tree_util.tree_map(jax.block_until_ready, out)
    ref = _reference(predictions, targets)
    for k in ("total_loss", "swh_loss", "mwd_loss", "mwp_loss"):
        assert jnp.allclose(out[k], ref[k], rtol=1e-4, atol=1e-6), (
            k, out[k], ref[k])


if __name__ == "__main__":
    key = jax.random.PRNGKey(0)
    keys = jax.random.split(key, 10)
    C = 4

    # Small demo consistent with the module: batch=2, nodes=16, 4 features
    # (tiny single-tile path).
    p = jax.random.normal(keys[0], (2, 16, C), dtype=jnp.float32)
    t = jax.random.normal(keys[1], (2, 16, C), dtype=jnp.float32)
    _check(p, t)

    # Exactly one (8, 128) tile, copy-free aligned view, no mask.
    p = jax.random.normal(keys[2], (2, 128, C), dtype=jnp.float32)
    t = jax.random.normal(keys[3], (2, 128, C), dtype=jnp.float32)
    _check(p, t)

    # Multi-block / two-partition path (aligned, no edge mask).
    p = jax.random.normal(keys[4], (4, 16640, C), dtype=jnp.float32)
    t = jax.random.normal(keys[5], (4, 16640, C), dtype=jnp.float32)
    _check(p, t)

    # Max-size blocks + clipped edge block + clamped duplicate block.
    p = jax.random.normal(keys[6], (10, 64000, C), dtype=jnp.float32)
    t = jax.random.normal(keys[7], (10, 64000, C), dtype=jnp.float32)
    _check(p, t)

    # Ragged tail path (B*N*4 not a multiple of 128): prefix kernel + JAX tail.
    p = jax.random.normal(keys[8], (3, 50, C), dtype=jnp.float32)
    t = jax.random.normal(keys[9], (3, 50, C), dtype=jnp.float32)
    _check(p, t)

    print("KERNEL_OK")
</pallas_src>

<mosaic_0001>
module attributes {stable_mosaic.version = 11 : i64} {
  func.func @_sse_kernel(%arg0: i32, %arg1: i32, %arg2: memref<8x128xf32, #tpu.memory_space<vmem>>, %arg3: memref<8x128xf32, #tpu.memory_space<vmem>>, %arg4: memref<1x8x128xf32, #tpu.memory_space<vmem>>) attributes {dimension_semantics = [#tpu.dimension_semantics<parallel>, #tpu.dimension_semantics<arbitrary>], iteration_bounds = array<i64: 1, 1>, scalar_prefetch = 0 : i64, scratch_operands = 0 : i64, tpu.core_type = #tpu.core_type<tc>, window_params = [{transform_indices = @transform_0, window_bounds = array<i64: 8, 128>}, {transform_indices = @transform_1, window_bounds = array<i64: 8, 128>}, {transform_indices = @transform_2, window_bounds = array<i64: 1, 8, 128>}]} {
    %c0_i32 = arith.constant 0 : i32
    %0 = arith.cmpi eq, %arg1, %c0_i32 : i32
    %1 = arith.extui %0 : i1 to i32
    %c0_i32_0 = arith.constant 0 : i32
    %2 = arith.cmpi ne, %1, %c0_i32_0 : i32
    scf.if %2 {
      %cst_10 = arith.constant 0.000000e+00 : f32
      %13 = vector.broadcast %cst_10 : f32 to vector<1x8x128xf32>
      %c0_11 = arith.constant 0 : index
      %c0_12 = arith.constant 0 : index
      %c0_13 = arith.constant 0 : index
      %14 = vector.load %arg4[%c0_11, %c0_12, %c0_13] : memref<1x8x128xf32, #tpu.memory_space<vmem>>, vector<1x8x128xf32>
      tpu.vector_store %arg4[%c0_11, %c0_12, %c0_13], %13 {strides = array<i32>} : memref<1x8x128xf32, #tpu.memory_space<vmem>>, vector<1x8x128xf32>,
    } else {
    }
    %c0 = arith.constant 0 : index
    %c0_1 = arith.constant 0 : index
    %3 = vector.load %arg2[%c0, %c0_1] : memref<8x128xf32, #tpu.memory_space<vmem>>, vector<8x128xf32>
    %c0_2 = arith.constant 0 : index
    %c0_3 = arith.constant 0 : index
    %4 = vector.load %arg3[%c0_2, %c0_3] : memref<8x128xf32, #tpu.memory_space<vmem>>, vector<8x128xf32>
    %5 = arith.subf %3, %4 : vector<8x128xf32>
    %6 = arith.mulf %5, %5 : vector<8x128xf32>
    %c0_4 = arith.constant 0 : index
    %c0_5 = arith.constant 0 : index
    %c0_6 = arith.constant 0 : index
    %7 = vector.load %arg4[%c0_4, %c0_5, %c0_6] : memref<1x8x128xf32, #tpu.memory_space<vmem>>, vector<1x8x128xf32>
    %8 = vector.shape_cast %6 : vector<8x128xf32> to vector<1x8x128xf32>
    %cst = arith.constant dense<0.000000e+00> : vector<8x128xf32>
    %9 = vector.multi_reduction <add>, %8, %cst [0] : vector<1x8x128xf32> to vector<8x128xf32>
    %10 = vector.shape_cast %9 : vector<8x128xf32> to vector<1x8x128xf32>
    %11 = arith.addf %7, %10 : vector<1x8x128xf32>
    %c0_7 = arith.constant 0 : index
    %c0_8 = arith.constant 0 : index
    %c0_9 = arith.constant 0 : index
    %12 = vector.load %arg4[%c0_7, %c0_8, %c0_9] : memref<1x8x128xf32, #tpu.memory_space<vmem>>, vector<1x8x128xf32>
    tpu.vector_store %arg4[%c0_7, %c0_8, %c0_9], %11 {strides = array<i32>} : memref<1x8x128xf32, #tpu.memory_space<vmem>>, vector<1x8x128xf32>,
    return
  }
  func.func @transform_0(%arg0: i32, %arg1: i32) -> (i32, i32) {
    %c1_i32 = arith.constant 1 : i32
    %0 = arith.muli %arg0, %c1_i32 : i32
    %1 = arith.addi %0, %arg1 : i32
    %c0_i32 = arith.constant 0 : i32
    %c0_i32_0 = arith.constant 0 : i32
    return %1, %c0_i32 : i32, i32
  }
  func.func @transform_1(%arg0: i32, %arg1: i32) -> (i32, i32) {
    %c1_i32 = arith.constant 1 : i32
    %0 = arith.muli %arg0, %c1_i32 : i32
    %1 = arith.addi %0, %arg1 : i32
    %c0_i32 = arith.constant 0 : i32
    %c0_i32_0 = arith.constant 0 : i32
    return %1, %c0_i32 : i32, i32
  }
  func.func @transform_2(%arg0: i32, %arg1: i32) -> (i32, i32, i32) {
    %c0_i32 = arith.constant 0 : i32
    %c0_i32_0 = arith.constant 0 : i32
    %c0_i32_1 = arith.constant 0 : i32
    return %arg0, %c0_i32, %c0_i32_0 : i32, i32, i32
  }
}

</mosaic_0001>

<llo_original>
// kernel: circular_loss.1
$region0: #{circular_loss.1}
  #allocation0 [shape = 'u32[]', space=smem, size = 0x4, offset = 0x4, fixed_abs, tag = 'smem constant byte address 0x4 - core index']
  #allocation1 [shape = 'u32[144,128]{1,0:T(1,128)}', space=vmem, size = 0x12000, scoped, tag = 'internal scratch']
  %s0 = inlined_call_operand.vmem [shape: f32[8,128], index: 0, kind: input, shape index: {}]
  %s1 = inlined_call_operand.vmem [shape: f32[8,128], index: 1, kind: input, shape index: {}]
  %s2 = inlined_call_operand.vmem [shape: f32[1,8,128], index: 2, kind: output, shape index: {}]
  %s3 = sld [smem:[#allocation0]]
  $region22: #{circular_loss.1} parent=0
    _
  %s5 = ssub.s32 1, %s3
  %s6 = scalar_select 0, %s5, %s3
  // Predicated region
  $region2: #{circular_loss.1} parent=0 // pred_check
    _
  $region3: #{circular_loss.1} parent=0 // pred_check_branch
    %8 = sbr.rel (0) target = $region5
  $region4: #{circular_loss.1} parent=0 // pred_region
    %s9 = sadd.s32 0, 0
    %p10 = scmp.lt.s32.totalorder %s9, 0
    %s11 = scalar_select %p10, %s9, 0
    %s12 = smul.addr %s11, 8
    %s13 = scalar_lea.vmem %s0, %s12
    %s14 = sadd.s32 0, 0
  $region5: #{circular_loss.1} parent=0 // pred_fallthru
    _
  // Predicated region
  $region6: #{circular_loss.1} parent=0 // pred_check
    _
  $region7: #{circular_loss.1} parent=0 // pred_check_branch
    %16 = sbr.rel (0) target = $region9
  $region8: #{circular_loss.1} parent=0 // pred_region
    %s17 = sadd.s32 0, 0
    %p18 = scmp.lt.s32.totalorder %s17, 0
    %s19 = scalar_select %p18, %s17, 0
    %s20 = smul.addr %s19, 8
    %s21 = scalar_lea.vmem %s1, %s20
    %s22 = sadd.s32 0, 0
  $region9: #{circular_loss.1} parent=0 // pred_fallthru
    _
  %s23 = sadd.s32 0, 0
  %p24 = scmp.lt.s32.totalorder %s23, 0
  %s25 = scalar_select %p24, %s23, 0
  %s26 = smul.addr %s25, 8
  %s27 = scalar_lea.vmem %s0, %s26
  %s28 = sadd.s32 0, 0
  %p29 = scmp.lt.s32.totalorder %s28, 0
  %s30 = scalar_select %p29, %s28, 0
  %s31 = smul.addr %s30, 8
  %s32 = scalar_lea.vmem %s1, %s31
  %s33 = sadd.s32 0, 0
  %p34 = scmp.lt.s32.totalorder %s33, 0
  %s35 = scalar_select %p34, %s33, 0
  %s36 = smul.addr %s35, 8
  %s37 = scalar_lea.vmem %s0, %s36
  %s38 = sadd.s32 0, 0
  %s39 = sadd.s32 0, 0
  %p40 = scmp.lt.s32.totalorder %s39, 0
  %s41 = scalar_select %p40, %s39, 0
  %s42 = smul.addr %s41, 8
  %s43 = scalar_lea.vmem %s1, %s42
  %s44 = sadd.s32 0, 0
  %p45 = scmp.eq.s32.totalorder 0, 0
  // Predicated region
  $region10: #{circular_loss.1} parent=0 // pred_check
    %p46 = pneg %p45
  $region11: #{circular_loss.1} parent=0 // pred_check_branch
    %48 = sbr.rel (%p46) target = $region13
  $region12: #{circular_loss.1} parent=0 // pred_region
    %49 = vst [vmem:[%s2] sm:$0xff] 0.0
  $region13: #{circular_loss.1} parent=0 // pred_fallthru
    _
  %v50 = vld [vmem:[%s37] sm:$0xff]
  %v51 = vld [vmem:[%s43] sm:$0xff]
  %v52 = vsub.f32 %v50, %v51
  %v53 = vmul.f32 %v52, %v52
  %v54 = vld [vmem:[%s2] sm:$0xff]
  %v55 = vadd.f32 %v53, 0.0
  %v56 = vadd.f32 %v54, %v55
  %57 = vst [vmem:[%s2] sm:$0xff] %v56
  // Predicated region
  $region14: #{circular_loss.1} parent=0 // pred_check
    _
  $region15: #{circular_loss.1} parent=0 // pred_check_branch
    %59 = sbr.rel (0) target = $region17
  $region16: #{circular_loss.1} parent=0 // pred_region
    _
  $region17: #{circular_loss.1} parent=0 // pred_fallthru
    _
  // Predicated region
  $region18: #{circular_loss.1} parent=0 // pred_check
    _
  $region19: #{circular_loss.1} parent=0 // pred_check_branch
    %61 = sbr.rel (0) target = $region21
  $region20: #{circular_loss.1} parent=0 // pred_region
    _
  $region21: #{circular_loss.1} parent=0 // pred_fallthru
    _

</llo_original>
